<compile_context>
chip_gen: v5e
topology: v5e:2x2
jax: 0.10.0
libtpu: 0.0.40
codegen_flags: <defaults>
</compile_context>

<pallas_src>
import functools

import jax
import jax.numpy as jnp
import numpy as np
from jax.experimental import pallas as pl
from jax.experimental.pallas import tpu as pltpu


def _aspp_kernel(x_ref, w_ref, b_ref, out_ref, xpad_s, *,
                 K, dil, pad, Wout, TH):
    """One (image, cout-tile, row-tile) grid step of conv + BN-bias + ReLU.

    x_ref   : (1, H, W, Cin)       unpadded NHWC image (resident across inner axes)
    w_ref   : (K*K*Cin, TC)        BN-scale-folded weights, flattened (ky, kx, ci)
    b_ref   : (1, TC)              folded BN bias
    out_ref : (1, TH*Wout, TC)     output rows [t*TH, t*TH+TH), flattened over (h, w)
    xpad_s  : (Hp, Wp, Cin) VMEM   zero-padded image scratch (persists across t)
    """
    t = pl.program_id(2)                       # row-tile index (sequential axis)
    H, W, Cin = x_ref.shape[1], x_ref.shape[2], x_ref.shape[3]

    # Build the zero-padded image in VMEM once per (image, cout-tile): the halo
    # is zero-filled here instead of materializing a padded copy in HBM.  The
    # fill runs at t == 0 of every (n, c) pair, so it stays correct even when
    # the outer axes are split across TensorCores.
    @pl.when(t == 0)
    def _fill_padded():
        xpad_s[...] = jnp.zeros_like(xpad_s)
        xpad_s[pad:pad + H, pad:pad + W, :] = x_ref[0].astype(xpad_s.dtype)

    # im2col slab for this row tile: (TH*Wout, K*K*Cin), built once, then a
    # single MXU contraction over K*K*Cin (instead of K*K tiny per-tap dots
    # chained through VPU accumulates).
    row0 = pl.multiple_of(t * TH, TH)
    taps = []
    for ky in range(K):
        for kx in range(K):
            xs = xpad_s[pl.ds(row0 + ky * dil, TH),
                        kx * dil:kx * dil + Wout, :]          # (TH, Wout, Cin)
            taps.append(xs.reshape(TH * Wout, Cin))
    lhs = jnp.concatenate(taps, axis=-1)                       # (TH*Wout, K*K*Cin)

    acc = jnp.dot(lhs, w_ref[...], preferred_element_type=jnp.float32)
    y = jnp.maximum(acc + b_ref[...], 0.0)                     # BN bias + ReLU
    out_ref[...] = y[None].astype(out_ref.dtype)               # flat store, no reshape


def aspp_module_forward(x_nchw, weight_oihw, bn_gamma, bn_beta, bn_mean,
                        bn_var, *, dilation, padding, eps=1e-5,
                        compute_dtype=jnp.float32, row_tile_rows=128):
    """Forward pass of _ASPPModule (inference BN semantics)."""
    N, Cin, H, W = x_nchw.shape
    Cout, Cin_w, K, K2 = weight_oihw.shape
    assert Cin_w == Cin and K == K2, "weight shape must be (Cout, Cin, K, K)"

    # General stride-1 dilated-conv output size (matches nn.Conv2d / lax.conv).
    Hout = H + 2 * padding - dilation * (K - 1)
    Wout = W + 2 * padding - dilation * (K - 1)
    assert Hout > 0 and Wout > 0, "padding/dilation incompatible with input size"

    # ---- glue: layout + BN folding (no padded activation copy in HBM) ------
    x = jnp.transpose(x_nchw, (0, 2, 3, 1)).astype(compute_dtype)      # NHWC
    w_hwio = jnp.transpose(weight_oihw, (2, 3, 1, 0)).astype(jnp.float32)
    inv_std = 1.0 / jnp.sqrt(bn_var.astype(jnp.float32) + eps)
    scale = bn_gamma.astype(jnp.float32) * inv_std                     # (Cout,)
    bias = (bn_beta.astype(jnp.float32)
            - bn_mean.astype(jnp.float32) * scale).reshape(1, Cout)
    # Fold BN scale into the conv weights; flatten taps (ky, kx, ci) for one dot.
    w_col = (w_hwio * scale[None, None, None, :]).reshape(K * K * Cin, Cout)
    w_col = w_col.astype(compute_dtype)

    # ---- tiling -------------------------------------------------------------
    # Row tile: keep the im2col slab / accumulator to ~row_tile_rows rows while
    # respecting the (8, 128) block constraints.
    TH = max(1, min(Hout, row_tile_rows // max(Wout, 1)))
    while TH > 1 and not (Hout % TH == 0 and (TH * Wout) % 8 == 0):
        TH -= 1
    if not (Hout % TH == 0 and (TH * Wout) % 8 == 0):
        TH = Hout                      # fall back: no row tiling
    HT = Hout // TH

    # Cout tile: full if small, else a 128-multiple divisor (lane-dense stores).
    if Cout <= 256:
        TC = Cout
    elif Cout % 256 == 0:
        TC = 256
    elif Cout % 128 == 0:
        TC = 128
    else:
        TC = Cout
    CT = Cout // TC

    Hp, Wp = H + 2 * padding, W + 2 * padding
    kernel = functools.partial(_aspp_kernel, K=K, dil=dilation, pad=padding,
                               Wout=Wout, TH=TH)

    # NOTE: for production ASPP shapes on v7x (64 MiB VMEM) re-derive
    # row_tile_rows / TC and set vmem_limit_bytes explicitly.
    out_flat = pl.pallas_call(
        kernel,
        out_shape=jax.ShapeDtypeStruct((N, Hout * Wout, Cout), x_nchw.dtype),
        grid=(N, CT, HT),
        in_specs=[
            pl.BlockSpec((1, H, W, Cin), lambda n, c, t: (n, 0, 0, 0)),
            pl.BlockSpec((K * K * Cin, TC), lambda n, c, t: (0, c)),
            pl.BlockSpec((1, TC), lambda n, c, t: (0, c)),
        ],
        out_specs=pl.BlockSpec((1, TH * Wout, TC), lambda n, c, t: (n, t, c)),
        scratch_shapes=[pltpu.VMEM((Hp, Wp, Cin), compute_dtype)],
        compiler_params=pltpu.CompilerParams(
            dimension_semantics=("parallel", "parallel", "arbitrary")),
    )(x, w_col, bias)

    out = out_flat.reshape(N, Hout, Wout, Cout)        # free (contiguous) reshape
    return jnp.transpose(out, (0, 3, 1, 2))            # back to NCHW


def _reference(x_nchw, weight_oihw, bn_gamma, bn_beta, bn_mean, bn_var, *,
               dilation, padding, eps=1e-5):
    """Pure-JAX reference using lax.conv_general_dilated (for verification)."""
    x = jnp.transpose(x_nchw, (0, 2, 3, 1))
    w = jnp.transpose(weight_oihw, (2, 3, 1, 0))
    y = jax.lax.conv_general_dilated(
        x, w, window_strides=(1, 1),
        padding=((padding, padding), (padding, padding)),
        rhs_dilation=(dilation, dilation),
        dimension_numbers=("NHWC", "HWIO", "NHWC"))
    inv_std = 1.0 / jnp.sqrt(bn_var + eps)
    y = (y - bn_mean) * inv_std * bn_gamma + bn_beta
    y = jnp.maximum(y, 0.0)
    return jnp.transpose(y, (0, 3, 1, 2))


if __name__ == "__main__":
    # Small shapes consistent with the module (inplanes=16, planes=32,
    # kernel_size=3, padding=dilation=2).
    N, Cin, H, W = 2, 16, 16, 16
    Cout, K = 32, 3
    dilation = 2
    padding = 2

    key = jax.random.PRNGKey(0)
    kx_key, kw_key = jax.random.split(key)

    x = jax.random.normal(kx_key, (N, Cin, H, W), dtype=jnp.float32)

    # Conv weight: kaiming_normal_-style scale (fan_in, relu gain) — deterministic.
    fan_in = Cin * K * K
    std = float(np.sqrt(2.0 / fan_in))
    weight = jax.random.normal(kw_key, (Cout, Cin, K, K), dtype=jnp.float32) * std

    # BatchNorm params per _init_weight: gamma=1, beta=0; non-trivial running
    # stats so the scale/bias folding is actually exercised.
    bn_gamma = jnp.ones((Cout,), jnp.float32)
    bn_beta = jnp.zeros((Cout,), jnp.float32)
    bn_mean = 0.1 * jnp.arange(Cout, dtype=jnp.float32) / Cout
    bn_var = 1.0 + 0.5 * jnp.arange(Cout, dtype=jnp.float32) / Cout

    out = aspp_module_forward(x, weight, bn_gamma, bn_beta, bn_mean, bn_var,
                              dilation=dilation, padding=padding)
    out = jax.block_until_ready(out)

    ref = _reference(x, weight, bn_gamma, bn_beta, bn_mean, bn_var,
                     dilation=dilation, padding=padding)
    np.testing.assert_allclose(np.asarray(out), np.asarray(ref),
                               rtol=1e-4, atol=1e-4)

    print("KERNEL_OK")
</pallas_src>

<mosaic_0001>
module attributes {stable_mosaic.version = 11 : i64} {
  func.func @_aspp_kernel(%arg0: i32, %arg1: i32, %arg2: i32, %arg3: memref<1x16x16x16xf32, #tpu.memory_space<vmem>>, %arg4: memref<144x32xf32, #tpu.memory_space<vmem>>, %arg5: memref<1x32xf32, #tpu.memory_space<vmem>>, %arg6: memref<1x128x32xf32, #tpu.memory_space<vmem>>, %arg7: memref<20x20x16xf32, #tpu.memory_space<vmem>>) attributes {dimension_semantics = [#tpu.dimension_semantics<parallel>, #tpu.dimension_semantics<parallel>, #tpu.dimension_semantics<arbitrary>], iteration_bounds = array<i64: 2, 1, 2>, scalar_prefetch = 0 : i64, scratch_operands = 1 : i64, tpu.core_type = #tpu.core_type<tc>, window_params = [{transform_indices = @transform_0, window_bounds = array<i64: 1, 16, 16, 16>}, {transform_indices = @transform_1, window_bounds = array<i64: 144, 32>}, {transform_indices = @transform_2, window_bounds = array<i64: 1, 32>}, {transform_indices = @transform_3, window_bounds = array<i64: 1, 128, 32>}]} {
    %c0_i32 = arith.constant 0 : i32
    %0 = arith.cmpi eq, %arg2, %c0_i32 : i32
    %1 = arith.extui %0 : i1 to i32
    %c0_i32_0 = arith.constant 0 : i32
    %2 = arith.cmpi ne, %1, %c0_i32_0 : i32
    scf.if %2 {
      %cst_31 = arith.constant 0.000000e+00 : f32
      %51 = vector.broadcast %cst_31 : f32 to vector<20x20x16xf32>
      %c0_32 = arith.constant 0 : index
      %c0_33 = arith.constant 0 : index
      %c0_34 = arith.constant 0 : index
      %52 = vector.load %arg7[%c0_32, %c0_33, %c0_34] : memref<20x20x16xf32, #tpu.memory_space<vmem>>, vector<20x20x16xf32>
      tpu.vector_store %arg7[%c0_32, %c0_33, %c0_34], %51 {strides = array<i32>} : memref<20x20x16xf32, #tpu.memory_space<vmem>>, vector<20x20x16xf32>,
      %c0_35 = arith.constant 0 : index
      %c0_36 = arith.constant 0 : index
      %c0_37 = arith.constant 0 : index
      %c0_38 = arith.constant 0 : index
      %53 = vector.load %arg3[%c0_35, %c0_36, %c0_37, %c0_38] : memref<1x16x16x16xf32, #tpu.memory_space<vmem>>, vector<1x16x16x16xf32>
      %54 = vector.shape_cast %53 : vector<1x16x16x16xf32> to vector<16x16x16xf32>
      %c2_39 = arith.constant 2 : index
      %c2_40 = arith.constant 2 : index
      %c0_41 = arith.constant 0 : index
      %55 = vector.load %arg7[%c2_39, %c2_40, %c0_41] : memref<20x20x16xf32, #tpu.memory_space<vmem>>, vector<16x16x16xf32>
      tpu.vector_store %arg7[%c2_39, %c2_40, %c0_41], %54 {strides = array<i32>} : memref<20x20x16xf32, #tpu.memory_space<vmem>>, vector<16x16x16xf32>,
    } else {
    }
    %c8_i32 = arith.constant 8 : i32
    %3 = arith.muli %arg2, %c8_i32 : i32
    %4 = tpu.assume_multiple %3, 8 : i32
    %c0_i32_1 = arith.constant 0 : i32
    %5 = arith.addi %4, %c0_i32_1 : i32
    %6 = arith.index_cast %5 : i32 to index
    %c0 = arith.constant 0 : index
    %c0_2 = arith.constant 0 : index
    %7 = vector.load %arg7[%6, %c0, %c0_2] : memref<20x20x16xf32, #tpu.memory_space<vmem>>, vector<8x16x16xf32>
    %8 = vector.shape_cast %7 : vector<8x16x16xf32> to vector<128x16xf32>
    %c0_i32_3 = arith.constant 0 : i32
    %9 = arith.addi %4, %c0_i32_3 : i32
    %10 = arith.index_cast %9 : i32 to index
    %c2 = arith.constant 2 : index
    %c0_4 = arith.constant 0 : index
    %11 = vector.load %arg7[%10, %c2, %c0_4] : memref<20x20x16xf32, #tpu.memory_space<vmem>>, vector<8x16x16xf32>
    %12 = vector.shape_cast %11 : vector<8x16x16xf32> to vector<128x16xf32>
    %c0_i32_5 = arith.constant 0 : i32
    %13 = arith.addi %4, %c0_i32_5 : i32
    %14 = arith.index_cast %13 : i32 to index
    %c4 = arith.constant 4 : index
    %c0_6 = arith.constant 0 : index
    %15 = vector.load %arg7[%14, %c4, %c0_6] : memref<20x20x16xf32, #tpu.memory_space<vmem>>, vector<8x16x16xf32>
    %16 = vector.shape_cast %15 : vector<8x16x16xf32> to vector<128x16xf32>
    %c2_i32 = arith.constant 2 : i32
    %17 = arith.addi %4, %c2_i32 : i32
    %18 = arith.index_cast %17 : i32 to index
    %c0_7 = arith.constant 0 : index
    %c0_8 = arith.constant 0 : index
    %19 = vector.load %arg7[%18, %c0_7, %c0_8] : memref<20x20x16xf32, #tpu.memory_space<vmem>>, vector<8x16x16xf32>
    %20 = vector.shape_cast %19 : vector<8x16x16xf32> to vector<128x16xf32>
    %c2_i32_9 = arith.constant 2 : i32
    %21 = arith.addi %4, %c2_i32_9 : i32
    %22 = arith.index_cast %21 : i32 to index
    %c2_10 = arith.constant 2 : index
    %c0_11 = arith.constant 0 : index
    %23 = vector.load %arg7[%22, %c2_10, %c0_11] : memref<20x20x16xf32, #tpu.memory_space<vmem>>, vector<8x16x16xf32>
    %24 = vector.shape_cast %23 : vector<8x16x16xf32> to vector<128x16xf32>
    %c2_i32_12 = arith.constant 2 : i32
    %25 = arith.addi %4, %c2_i32_12 : i32
    %26 = arith.index_cast %25 : i32 to index
    %c4_13 = arith.constant 4 : index
    %c0_14 = arith.constant 0 : index
    %27 = vector.load %arg7[%26, %c4_13, %c0_14] : memref<20x20x16xf32, #tpu.memory_space<vmem>>, vector<8x16x16xf32>
    %28 = vector.shape_cast %27 : vector<8x16x16xf32> to vector<128x16xf32>
    %c4_i32 = arith.constant 4 : i32
    %29 = arith.addi %4, %c4_i32 : i32
    %30 = arith.index_cast %29 : i32 to index
    %c0_15 = arith.constant 0 : index
    %c0_16 = arith.constant 0 : index
    %31 = vector.load %arg7[%30, %c0_15, %c0_16] : memref<20x20x16xf32, #tpu.memory_space<vmem>>, vector<8x16x16xf32>
    %32 = vector.shape_cast %31 : vector<8x16x16xf32> to vector<128x16xf32>
    %c4_i32_17 = arith.constant 4 : i32
    %33 = arith.addi %4, %c4_i32_17 : i32
    %34 = arith.index_cast %33 : i32 to index
    %c2_18 = arith.constant 2 : index
    %c0_19 = arith.constant 0 : index
    %35 = vector.load %arg7[%34, %c2_18, %c0_19] : memref<20x20x16xf32, #tpu.memory_space<vmem>>, vector<8x16x16xf32>
    %36 = vector.shape_cast %35 : vector<8x16x16xf32> to vector<128x16xf32>
    %c4_i32_20 = arith.constant 4 : i32
    %37 = arith.addi %4, %c4_i32_20 : i32
    %38 = arith.index_cast %37 : i32 to index
    %c4_21 = arith.constant 4 : index
    %c0_22 = arith.constant 0 : index
    %39 = vector.load %arg7[%38, %c4_21, %c0_22] : memref<20x20x16xf32, #tpu.memory_space<vmem>>, vector<8x16x16xf32>
    %40 = vector.shape_cast %39 : vector<8x16x16xf32> to vector<128x16xf32>
    %41 = tpu.concatenate %8, %12, %16, %20, %24, %28, %32, %36, %40 in 1 : vector<128x16xf32>, vector<128x16xf32>, vector<128x16xf32>, vector<128x16xf32>, vector<128x16xf32>, vector<128x16xf32>, vector<128x16xf32>, vector<128x16xf32>, vector<128x16xf32> -> vector<128x144xf32>
    %c0_23 = arith.constant 0 : index
    %c0_24 = arith.constant 0 : index
    %42 = vector.load %arg4[%c0_23, %c0_24] : memref<144x32xf32, #tpu.memory_space<vmem>>, vector<144x32xf32>
    %cst = arith.constant dense<0.000000e+00> : vector<128x32xf32>
    %43 = tpu.matmul %41, %42, %cst {dimension_numbers = #tpu.dot_dimension_numbers<[1], [0], [0], [1], [0, 0, 1, 1], [], []>} : vector<128x144xf32>, vector<144x32xf32>, vector<128x32xf32> -> vector<128x32xf32>
    %c0_25 = arith.constant 0 : index
    %c0_26 = arith.constant 0 : index
    %44 = vector.load %arg5[%c0_25, %c0_26] : memref<1x32xf32, #tpu.memory_space<vmem>>, vector<1x32xf32>
    %45 = vector.broadcast %44 : vector<1x32xf32> to vector<128x32xf32>
    %46 = arith.addf %43, %45 : vector<128x32xf32>
    %cst_27 = arith.constant 0.000000e+00 : f32
    %47 = vector.broadcast %cst_27 : f32 to vector<128x32xf32>
    %48 = arith.maximumf %46, %47 : vector<128x32xf32>
    %49 = vector.shape_cast %48 : vector<128x32xf32> to vector<1x128x32xf32>
    %c0_28 = arith.constant 0 : index
    %c0_29 = arith.constant 0 : index
    %c0_30 = arith.constant 0 : index
    %50 = vector.load %arg6[%c0_28, %c0_29, %c0_30] : memref<1x128x32xf32, #tpu.memory_space<vmem>>, vector<1x128x32xf32>
    tpu.vector_store %arg6[%c0_28, %c0_29, %c0_30], %49 {strides = array<i32>} : memref<1x128x32xf32, #tpu.memory_space<vmem>>, vector<1x128x32xf32>,
    return
  }
  func.func @transform_0(%arg0: i32, %arg1: i32, %arg2: i32) -> (i32, i32, i32, i32) {
    %c0_i32 = arith.constant 0 : i32
    %c0_i32_0 = arith.constant 0 : i32
    %c0_i32_1 = arith.constant 0 : i32
    %c0_i32_2 = arith.constant 0 : i32
    return %arg0, %c0_i32, %c0_i32_0, %c0_i32_1 : i32, i32, i32, i32
  }
  func.func @transform_1(%arg0: i32, %arg1: i32, %arg2: i32) -> (i32, i32) {
    %c0_i32 = arith.constant 0 : i32
    %c0_i32_0 = arith.constant 0 : i32
    return %c0_i32, %arg1 : i32, i32
  }
  func.func @transform_2(%arg0: i32, %arg1: i32, %arg2: i32) -> (i32, i32) {
    %c0_i32 = arith.constant 0 : i32
    %c0_i32_0 = arith.constant 0 : i32
    return %c0_i32, %arg1 : i32, i32
  }
  func.func @transform_3(%arg0: i32, %arg1: i32, %arg2: i32) -> (i32, i32, i32) {
    %c0_i32 = arith.constant 0 : i32
    return %arg0, %arg2, %arg1 : i32, i32, i32
  }
}

</mosaic_0001>

<llo_original>
// kernel: tpu_custom_call.1
$region0: #{tpu_custom_call.1}
  #allocation0 [shape = 'u32[]', space=smem, size = 0x4, offset = 0x4, fixed_abs, tag = 'smem constant byte address 0x4 - core index']
  #allocation1 [shape = 'u32[72,128]{1,0:T(1,128)}', space=vmem, size = 0x9000, scoped, tag = 'internal scratch']
  #allocation2 [shape = 'f32[20,20,16]{2,1,0:T(8,128)}', space=vmem, size = 0x3c000, scoped, tag = 'scratch operand']
  %s0 = inlined_call_operand.hbm [shape: f32[2,16,16,16], index: 0, kind: input, shape index: {}]
  %s1 = inlined_call_operand.vmem [shape: f32[144,32], index: 1, kind: input, shape index: {}]
  %s2 = inlined_call_operand.vmem [shape: f32[1,32], index: 2, kind: input, shape index: {}]
  %s3 = inlined_call_operand.vmem [shape: f32[2,256,32], index: 3, kind: output, shape index: {}]
  %s4 = sld [smem:[#allocation0]]
  $region53: #{tpu_custom_call.1} parent=0
    _
  %s6 = ssub.s32 1, %s4
  %s7 = scalar_select 0, %s6, %s4
  $region1: #{tpu_custom_call.1} parent=0
    #allocation3 [shape = 'u8[262144]{0}', space=vmem, size = 0x40000, scoped, tag = 'input window, operand 0']
    #allocation4 [shape = 's32[2]{0}', space=sflag, size = 0x8, scoped, tag = 'scoped memory for tpu_custom_call.1']
    %8 = vsyncpa [#allocation4], 0
    %s9 = scalar_lea.sflag [#allocation4], 1
    %10 = vsyncpa %s9, 0
    loop: start=0, step=1, limit=6
    $region2: #{tpu_custom_call.1} parent=1 // loop_pre_header
      _
    $region3: #{tpu_custom_call.1} parent=1 // loop_header
      %s12 = sphi 0, %s16
      %p13 = scmp.ge.s32.totalorder %s12, 6
      %s19 = sphi 0, %s38
      %s20 = sphi 0, %s34
      %s21 = sphi 0, %s30
      %s22 = sphi 0, %s19
      %s23 = sphi 0, %s20
      %s24 = sphi 0, %s21
      %s25 = sphi 0, %s22
      %s26 = sphi 0, %s23
      %s27 = sphi 0, %s24
      %s41 = sphi 0, %s43
      %s44 = sphi 0, %s41
      %s45 = sphi 0, %s44
      %s61 = sphi 0, %s45
      %s67 = sphi 0, %s69
      %s70 = sphi 0, %s67
      %s71 = sphi 0, %s70
      %s87 = sphi 0, %s71
      %s93 = sphi 0, %s95
      %s96 = sphi 0, %s93
      %s97 = sphi 0, %s96
      %s113 = sphi 0, %s97
      %s123 = sphi 0, %s125
      %s126 = sphi 0, %s123
      %s127 = sphi 0, %s126
      %s143 = sphi 0, %s127
    $region4: #{tpu_custom_call.1} parent=1 // loop_header_branch
      %15 = sbr.rel (%p13) target = $region8
    $region5: #{tpu_custom_call.1} parent=1 // loop_body
      %s17 = ssub.s32 %s12, 1
      %s18 = ssub.s32 %s12, 2
      %s28 = sadd.s32 1, %s21
      %p29 = scmp.ge.s32.totalorder %s28, 2
      %s30 = scalar_select %p29, 0, %s28
      %s31 = sadd.s32 1, %s20
      %s32 = scalar_select %p29, %s31, %s20
      %p33 = scmp.ge.s32.totalorder %s32, 1
      %s34 = scalar_select %p33, 0, %s32
      %s35 = sadd.s32 1, %s19
      %s36 = scalar_select %p33, %s35, %s19
      %p37 = scmp.ge.s32.totalorder %s36, 2
      %s38 = scalar_select %p37, 0, %s36
      %s39 = ssub.s32 %s19, %s38
      %p40 = scmp.eq.s32.totalorder %s39, 0
      %s42 = sadd.s32 %s41, 1
      %s43 = scalar_select %p40, %s41, %s42
      %p46 = pneg %p40
      %p47 = scmp.eq.s32.totalorder %s12, 3
      %p48 = por %p46, %p47
      %p49 = scmp.ne.s32.totalorder %s41, %s44
      %p50 = scmp.eq.s32.totalorder %s12, 0
      %p51 = por %p49, %p50
      %p52 = scmp.ne.s32.totalorder %s41, %s44
      %p53 = scmp.eq.s32.totalorder %s17, 3
      %p54 = por %p52, %p53
      %p55 = scmp.ne.s32.totalorder %s44, %s45
      %p56 = scmp.eq.s32.totalorder %s17, 0
      %p57 = por %p55, %p56
      %p58 = scmp.ne.s32.totalorder %s44, %s45
      %p59 = scmp.eq.s32.totalorder %s18, 3
      %p60 = por %p58, %p59
      %p62 = scmp.ne.s32.totalorder %s45, %s61
      %p63 = scmp.eq.s32.totalorder %s18, 0
      %p64 = por %p62, %p63
      %s65 = ssub.s32 %s20, %s34
      %p66 = scmp.eq.s32.totalorder %s65, 0
      %s68 = sadd.s32 %s67, 1
      %s69 = scalar_select %p66, %s67, %s68
      %p72 = pneg %p66
      %p73 = scmp.eq.s32.totalorder %s12, 3
      %p74 = por %p72, %p73
      %p75 = scmp.ne.s32.totalorder %s67, %s70
      %p76 = scmp.eq.s32.totalorder %s12, 0
      %p77 = por %p75, %p76
      %p78 = scmp.ne.s32.totalorder %s67, %s70
      %p79 = scmp.eq.s32.totalorder %s17, 3
      %p80 = por %p78, %p79
      %p81 = scmp.ne.s32.totalorder %s70, %s71
      %p82 = scmp.eq.s32.totalorder %s17, 0
      %p83 = por %p81, %p82
      %p84 = scmp.ne.s32.totalorder %s70, %s71
      %p85 = scmp.eq.s32.totalorder %s18, 3
      %p86 = por %p84, %p85
      %p88 = scmp.ne.s32.totalorder %s71, %s87
      %p89 = scmp.eq.s32.totalorder %s18, 0
      %p90 = por %p88, %p89
      %s91 = ssub.s32 %s20, %s34
      %p92 = scmp.eq.s32.totalorder %s91, 0
      %s94 = sadd.s32 %s93, 1
      %s95 = scalar_select %p92, %s93, %s94
      %p98 = pneg %p92
      %p99 = scmp.eq.s32.totalorder %s12, 3
      %p100 = por %p98, %p99
      %p101 = scmp.ne.s32.totalorder %s93, %s96
      %p102 = scmp.eq.s32.totalorder %s12, 0
      %p103 = por %p101, %p102
      %p104 = scmp.ne.s32.totalorder %s93, %s96
      %p105 = scmp.eq.s32.totalorder %s17, 3
      %p106 = por %p104, %p105
      %p107 = scmp.ne.s32.totalorder %s96, %s97
      %p108 = scmp.eq.s32.totalorder %s17, 0
      %p109 = por %p107, %p108
      %p110 = scmp.ne.s32.totalorder %s96, %s97
      %p111 = scmp.eq.s32.totalorder %s18, 3
      %p112 = por %p110, %p111
      %p114 = scmp.ne.s32.totalorder %s97, %s113
      %p115 = scmp.eq.s32.totalorder %s18, 0
      %p116 = por %p114, %p115
      %s117 = ssub.s32 %s19, %s38
      %s118 = ssub.s32 %s21, %s30
      %s119 = sor.u32 %s117, %s118
      %s120 = ssub.s32 %s20, %s34
      %s121 = sor.u32 %s119, %s120
      %p122 = scmp.eq.s32.totalorder %s121, 0
      %s124 = sadd.s32 %s123, 1
      %s125 = scalar_select %p122, %s123, %s124
      %p128 = pneg %p122
      %p129 = scmp.eq.s32.totalorder %s12, 3
      %p130 = por %p128, %p129
      %p131 = scmp.ne.s32.totalorder %s123, %s126
      %p132 = scmp.eq.s32.totalorder %s12, 0
      %p133 = por %p131, %p132
      %p134 = scmp.ne.s32.totalorder %s123, %s126
      %p135 = scmp.eq.s32.totalorder %s17, 3
      %p136 = por %p134, %p135
      %p137 = scmp.ne.s32.totalorder %s126, %s127
      %p138 = scmp.eq.s32.totalorder %s17, 0
      %p139 = por %p137, %p138
      %p140 = scmp.ne.s32.totalorder %s126, %s127
      %p141 = scmp.eq.s32.totalorder %s18, 3
      %p142 = por %p140, %p141
      %p144 = scmp.ne.s32.totalorder %s127, %s143
      %p145 = scmp.eq.s32.totalorder %s18, 0
      %p146 = por %p144, %p145
      %p147 = scmp.le.s32.totalorder 1, %s12
      %p148 = scmp.lt.s32.totalorder %s12, 5
      %p149 = pnand %p147, %p148
      %p150 = pneg %p149
      // Predicated region
      $region9: #{tpu_custom_call.1} parent=5 // pred_check
        _
      $region10: #{tpu_custom_call.1} parent=5 // pred_check_branch
        %152 = sbr.rel (%p149) target = $region12
      $region11: #{tpu_custom_call.1} parent=5 // pred_region
        %s153 = ssub.s32 %s12, 1
        // Predicated region
        $region13: #{tpu_custom_call.1} parent=11 // pred_check
          %p154 = pneg %p83
        $region14: #{tpu_custom_call.1} parent=11 // pred_check_branch
          %156 = sbr.rel (%p154) target = $region16
        $region15: #{tpu_custom_call.1} parent=11 // pred_region
          %p157 = scmp.lt.s32.totalorder %s23, 0
          %s158 = scalar_select %p157, %s23, 0
          %s159 = smul.addr %s158, 8
          %s160 = scalar_lea.vmem %s1, %s159
        $region16: #{tpu_custom_call.1} parent=11 // pred_fallthru
          _
        // Predicated region
        $region17: #{tpu_custom_call.1} parent=11 // pred_check
          %p161 = pneg %p109
        $region18: #{tpu_custom_call.1} parent=11 // pred_check_branch
          %163 = sbr.rel (%p161) target = $region20
        $region19: #{tpu_custom_call.1} parent=11 // pred_region
          %p164 = scmp.lt.s32.totalorder %s23, 0
          %s165 = scalar_select %p164, %s23, 0
          %s166 = scalar_lea.vmem %s2, %s165
        $region20: #{tpu_custom_call.1} parent=11 // pred_fallthru
          _
      $region12: #{tpu_custom_call.1} parent=5 // pred_fallthru
        _
      %p167 = scmp.lt.s32.totalorder %s12, 4
      // Predicated region
      $region21: #{tpu_custom_call.1} parent=5 // pred_check
        %p168 = pneg %p167
      $region22: #{tpu_custom_call.1} parent=5 // pred_check_branch
        %170 = sbr.rel (%p168) target = $region24
      $region23: #{tpu_custom_call.1} parent=5 // pred_region
        // Predicated region
        $region25: #{tpu_custom_call.1} parent=23 // pred_check
          %p171 = pneg %p51
        $region26: #{tpu_custom_call.1} parent=23 // pred_check_branch
          %173 = sbr.rel (%p171) target = $region28
        $region27: #{tpu_custom_call.1} parent=23 // pred_region
          %s174 = sand.u32 %s41, 1
          %s175 = scalar_lea.sflag [#allocation4], %s174
          %s176 = sand.u32 %s41, 1
          %s177 = smul.addr %s176, 256
          %s178 = scalar_lea.vmem [#allocation3], %s177
          %180 = vsyncadd %s175, 0
          %s181 = smul.addr %s19, 32
          %s182 = smul.addr %s181, 8
          %s183 = scalar_lea.hbm %s0, %s182
          %s184 = sshll.u32 %s183, 4
          %s185 = int_to_ptr.hbm [resolvable:$true] %s184
          %s186 = sshll.u32 %s178, 4
          %s187 = int_to_ptr.vmem [resolvable:$true] %s186
          %192 = dma.hbm_to_vmem [thread:$0]  %s185, 4096, %s187, %s175, 128, 128, 8
        $region28: #{tpu_custom_call.1} parent=23 // pred_fallthru
          _
      $region24: #{tpu_custom_call.1} parent=5 // pred_fallthru
        _
      %p193 = scmp.le.s32.totalorder 1, %s12
      %p194 = scmp.lt.s32.totalorder %s12, 5
      %p195 = pnand %p193, %p194
      %p196 = pneg %p195
      // Predicated region
      $region29: #{tpu_custom_call.1} parent=5 // pred_check
        _
      $region30: #{tpu_custom_call.1} parent=5 // pred_check_branch
        %198 = sbr.rel (%p195) target = $region32
      $region31: #{tpu_custom_call.1} parent=5 // pred_region
        %s199 = ssub.s32 %s12, 1
        %s200 = sand.u32 %s44, 1
        %s201 = scalar_lea.sflag [#allocation4], %s200
        %s202 = sand.u32 %s44, 1
        %s203 = smul.addr %s202, 256
        %s204 = scalar_lea.vmem [#allocation3], %s203
        // Predicated region
        $region33: #{tpu_custom_call.1} parent=31 // pred_check
          %p205 = pneg %p57
        $region34: #{tpu_custom_call.1} parent=31 // pred_check_branch
          %207 = sbr.rel (%p205) target = $region36
        $region35: #{tpu_custom_call.1} parent=31 // pred_region
          %209 = dma.done %s201, 4096
        $region36: #{tpu_custom_call.1} parent=31 // pred_fallthru
          _
        %s210 = sand.u32 %s44, 1
        %s211 = scalar_lea.sflag [#allocation4], %s210
        %s212 = sand.u32 %s44, 1
        %s213 = smul.addr %s212, 256
        %s214 = scalar_lea.vmem [#allocation3], %s213
        %p215 = pneg %p57
        %p216 = pneg %p54
        %p217 = scmp.lt.s32.totalorder %s23, 0
        %s218 = scalar_select %p217, %s23, 0
        %s219 = smul.addr %s218, 8
        %s220 = scalar_lea.vmem %s1, %s219
        %p221 = pneg %p83
        %p222 = pneg %p80
        %p223 = scmp.lt.s32.totalorder %s23, 0
        %s224 = scalar_select %p223, %s23, 0
        %s225 = scalar_lea.vmem %s2, %s224
        %p226 = pneg %p109
        %p227 = pneg %p106
        %p228 = pneg %p139
        %p229 = pneg %p136
        %s230 = smul.u32 16, %s24
        %p231 = scmp.lt.s32.totalorder %s22, 1
        %s232 = scalar_select %p231, %s22, 1
        %p233 = scmp.lt.s32.totalorder %s230, 31
        %s234 = scalar_select %p233, %s230, 31
        %p235 = scmp.lt.s32.totalorder %s23, 0
        %s236 = scalar_select %p235, %s23, 0
        %s237 = sadd.s32 %s236, %s234
        %s238 = smul.addr %s232, 32
        %s239 = sadd.s32 %s237, %s238
        %s240 = smul.addr %s239, 8
        %s241 = scalar_lea.vmem %s3, %s240
        %p242 = scmp.lt.s32.totalorder %s23, 0
        %s243 = scalar_select %p242, %s23, 0
        %s244 = smul.addr %s243, 8
        %s245 = scalar_lea.vmem %s1, %s244
        %p246 = scmp.lt.s32.totalorder %s23, 0
        %s247 = scalar_select %p246, %s23, 0
        %s248 = scalar_lea.vmem %s2, %s247
        %s249 = smul.u32 16, %s24
        %p250 = scmp.lt.s32.totalorder %s22, 1
        %s251 = scalar_select %p250, %s22, 1
        %p252 = scmp.lt.s32.totalorder %s249, 31
        %s253 = scalar_select %p252, %s249, 31
        %p254 = scmp.lt.s32.totalorder %s23, 0
        %s255 = scalar_select %p254, %s23, 0
        %s256 = sadd.s32 %s255, %s253
        %s257 = smul.addr %s251, 32
        %s258 = sadd.s32 %s256, %s257
        %s259 = smul.addr %s258, 8
        %s260 = scalar_lea.vmem %s3, %s259
        %s261 = smul.u32 16, %s24
        %p262 = scmp.eq.s32.totalorder %s24, 0
        // Predicated region
        $region37: #{tpu_custom_call.1} parent=31 // pred_check
          %p263 = pneg %p262
        $region38: #{tpu_custom_call.1} parent=31 // pred_check_branch
          %265 = sbr.rel (%p263) target = $region40
        $region39: #{tpu_custom_call.1} parent=31 // pred_region
          %vm266 = vcmask 130048
          %267 = vst.msk [vmem:[#allocation2] sm:$0xff] %vm266, 0.0
          %268 = vst.msk [vmem:[#allocation2 + $0x8] sm:$0xff] %vm266, 0.0
          %vm269 = vcmask 125952
          %270 = vst.msk [vmem:[#allocation2 + $0x10] sm:$0xf] %vm269, 0.0
          %271 = vst.msk [vmem:[#allocation2 + $0x18] sm:$0xff] %vm266, 0.0
          %272 = vst.msk [vmem:[#allocation2 + $0x20] sm:$0xff] %vm266, 0.0
          %273 = vst.msk [vmem:[#allocation2 + $0x28] sm:$0xf] %vm269, 0.0
          %274 = vst.msk [vmem:[#allocation2 + $0x30] sm:$0xff] %vm266, 0.0
          %275 = vst.msk [vmem:[#allocation2 + $0x38] sm:$0xff] %vm266, 0.0
          %276 = vst.msk [vmem:[#allocation2 + $0x40] sm:$0xf] %vm269, 0.0
          %277 = vst.msk [vmem:[#allocation2 + $0x48] sm:$0xff] %vm266, 0.0
          %278 = vst.msk [vmem:[#allocation2 + $0x50] sm:$0xff] %vm266, 0.0
          %279 = vst.msk [vmem:[#allocation2 + $0x58] sm:$0xf] %vm269, 0.0
          %280 = vst.msk [vmem:[#allocation2 + $0x60] sm:$0xff] %vm266, 0.0
          %281 = vst.msk [vmem:[#allocation2 + $0x68] sm:$0xff] %vm266, 0.0
          %282 = vst.msk [vmem:[#allocation2 + $0x70] sm:$0xf] %vm269, 0.0
          %283 = vst.msk [vmem:[#allocation2 + $0x78] sm:$0xff] %vm266, 0.0
          %284 = vst.msk [vmem:[#allocation2 + $0x80] sm:$0xff] %vm266, 0.0
          %285 = vst.msk [vmem:[#allocation2 + $0x88] sm:$0xf] %vm269, 0.0
          %286 = vst.msk [vmem:[#allocation2 + $0x90] sm:$0xff] %vm266, 0.0
          %287 = vst.msk [vmem:[#allocation2 + $0x98] sm:$0xff] %vm266, 0.0
          %288 = vst.msk [vmem:[#allocation2 + $0xa0] sm:$0xf] %vm269, 0.0
          %289 = vst.msk [vmem:[#allocation2 + $0xa8] sm:$0xff] %vm266, 0.0
          %290 = vst.msk [vmem:[#allocation2 + $0xb0] sm:$0xff] %vm266, 0.0
          %291 = vst.msk [vmem:[#allocation2 + $0xb8] sm:$0xf] %vm269, 0.0
          %292 = vst.msk [vmem:[#allocation2 + $0xc0] sm:$0xff] %vm266, 0.0
          %293 = vst.msk [vmem:[#allocation2 + $0xc8] sm:$0xff] %vm266, 0.0
          %294 = vst.msk [vmem:[#allocation2 + $0xd0] sm:$0xf] %vm269, 0.0
          %295 = vst.msk [vmem:[#allocation2 + $0xd8] sm:$0xff] %vm266, 0.0
          %296 = vst.msk [vmem:[#allocation2 + $0xe0] sm:$0xff] %vm266, 0.0
          %297 = vst.msk [vmem:[#allocation2 + $0xe8] sm:$0xf] %vm269, 0.0
          %298 = vst.msk [vmem:[#allocation2 + $0xf0] sm:$0xff] %vm266, 0.0
          %299 = vst.msk [vmem:[#allocation2 + $0xf8] sm:$0xff] %vm266, 0.0
          %300 = vst.msk [vmem:[#allocation2 + $0x100] sm:$0xf] %vm269, 0.0
          %301 = vst.msk [vmem:[#allocation2 + $0x108] sm:$0xff] %vm266, 0.0
          %302 = vst.msk [vmem:[#allocation2 + $0x110] sm:$0xff] %vm266, 0.0
          %303 = vst.msk [vmem:[#allocation2 + $0x118] sm:$0xf] %vm269, 0.0
          %304 = vst.msk [vmem:[#allocation2 + $0x120] sm:$0xff] %vm266, 0.0
          %305 = vst.msk [vmem:[#allocation2 + $0x128] sm:$0xff] %vm266, 0.0
          %306 = vst.msk [vmem:[#allocation2 + $0x130] sm:$0xf] %vm269, 0.0
          %307 = vst.msk [vmem:[#allocation2 + $0x138] sm:$0xff] %vm266, 0.0
          %308 = vst.msk [vmem:[#allocation2 + $0x140] sm:$0xff] %vm266, 0.0
          %309 = vst.msk [vmem:[#allocation2 + $0x148] sm:$0xf] %vm269, 0.0
          %310 = vst.msk [vmem:[#allocation2 + $0x150] sm:$0xff] %vm266, 0.0
          %311 = vst.msk [vmem:[#allocation2 + $0x158] sm:$0xff] %vm266, 0.0
          %312 = vst.msk [vmem:[#allocation2 + $0x160] sm:$0xf] %vm269, 0.0
          %313 = vst.msk [vmem:[#allocation2 + $0x168] sm:$0xff] %vm266, 0.0
          %314 = vst.msk [vmem:[#allocation2 + $0x170] sm:$0xff] %vm266, 0.0
          %315 = vst.msk [vmem:[#allocation2 + $0x178] sm:$0xf] %vm269, 0.0
          %316 = vst.msk [vmem:[#allocation2 + $0x180] sm:$0xff] %vm266, 0.0
          %317 = vst.msk [vmem:[#allocation2 + $0x188] sm:$0xff] %vm266, 0.0
          %318 = vst.msk [vmem:[#allocation2 + $0x190] sm:$0xf] %vm269, 0.0
          %319 = vst.msk [vmem:[#allocation2 + $0x198] sm:$0xff] %vm266, 0.0
          %320 = vst.msk [vmem:[#allocation2 + $0x1a0] sm:$0xff] %vm266, 0.0
          %321 = vst.msk [vmem:[#allocation2 + $0x1a8] sm:$0xf] %vm269, 0.0
          %322 = vst.msk [vmem:[#allocation2 + $0x1b0] sm:$0xff] %vm266, 0.0
          %323 = vst.msk [vmem:[#allocation2 + $0x1b8] sm:$0xff] %vm266, 0.0
          %324 = vst.msk [vmem:[#allocation2 + $0x1c0] sm:$0xf] %vm269, 0.0
          %325 = vst.msk [vmem:[#allocation2 + $0x1c8] sm:$0xff] %vm266, 0.0
          %326 = vst.msk [vmem:[#allocation2 + $0x1d0] sm:$0xff] %vm266, 0.0
          %327 = vst.msk [vmem:[#allocation2 + $0x1d8] sm:$0xf] %vm269, 0.0
          %v328 = vld [vmem:[%s204] sm:$0xff]
          %v329 = vld [vmem:[%s204 + $0x8] sm:$0xff]
          %v330 = vld [vmem:[%s204 + $0x10] sm:$0xff]
          %v331 = vld [vmem:[%s204 + $0x18] sm:$0xff]
          %v332 = vld [vmem:[%s204 + $0x20] sm:$0xff]
          %v333 = vld [vmem:[%s204 + $0x28] sm:$0xff]
          %v334 = vld [vmem:[%s204 + $0x30] sm:$0xff]
          %v335 = vld [vmem:[%s204 + $0x38] sm:$0xff]
          %v336 = vld [vmem:[%s204 + $0x40] sm:$0xff]
          %v337 = vld [vmem:[%s204 + $0x48] sm:$0xff]
          %v338 = vld [vmem:[%s204 + $0x50] sm:$0xff]
          %v339 = vld [vmem:[%s204 + $0x58] sm:$0xff]
          %v340 = vld [vmem:[%s204 + $0x60] sm:$0xff]
          %v341 = vld [vmem:[%s204 + $0x68] sm:$0xff]
          %v342 = vld [vmem:[%s204 + $0x70] sm:$0xff]
          %v343 = vld [vmem:[%s204 + $0x78] sm:$0xff]
          %v344 = vld [vmem:[%s204 + $0x80] sm:$0xff]
          %v345 = vld [vmem:[%s204 + $0x88] sm:$0xff]
          %v346 = vld [vmem:[%s204 + $0x90] sm:$0xff]
          %v347 = vld [vmem:[%s204 + $0x98] sm:$0xff]
          %v348 = vld [vmem:[%s204 + $0xa0] sm:$0xff]
          %v349 = vld [vmem:[%s204 + $0xa8] sm:$0xff]
          %v350 = vld [vmem:[%s204 + $0xb0] sm:$0xff]
          %v351 = vld [vmem:[%s204 + $0xb8] sm:$0xff]
          %v352 = vld [vmem:[%s204 + $0xc0] sm:$0xff]
          %v353 = vld [vmem:[%s204 + $0xc8] sm:$0xff]
          %v354 = vld [vmem:[%s204 + $0xd0] sm:$0xff]
          %v355 = vld [vmem:[%s204 + $0xd8] sm:$0xff]
          %v356 = vld [vmem:[%s204 + $0xe0] sm:$0xff]
          %v357 = vld [vmem:[%s204 + $0xe8] sm:$0xff]
          %v358 = vld [vmem:[%s204 + $0xf0] sm:$0xff]
          %v359 = vld [vmem:[%s204 + $0xf8] sm:$0xff]
          %s360 = scalar_lea.vmem [#allocation2], 48
          %361 = vst.msk [vmem:[%s360 + $0x2] sm:$0xff] %vm266, %v328
          %362 = vst.msk [vmem:[%s360 + $0xa] sm:$0xff] %vm266, %v329
          %363 = vst.msk [vmem:[%s360 + $0x1a] sm:$0xff] %vm266, %v330
          %364 = vst.msk [vmem:[%s360 + $0x22] sm:$0xff] %vm266, %v331
          %365 = vst.msk [vmem:[%s360 + $0x32] sm:$0xff] %vm266, %v332
          %366 = vst.msk [vmem:[%s360 + $0x3a] sm:$0xff] %vm266, %v333
          %367 = vst.msk [vmem:[%s360 + $0x4a] sm:$0xff] %vm266, %v334
          %368 = vst.msk [vmem:[%s360 + $0x52] sm:$0xff] %vm266, %v335
          %369 = vst.msk [vmem:[%s360 + $0x62] sm:$0xff] %vm266, %v336
          %370 = vst.msk [vmem:[%s360 + $0x6a] sm:$0xff] %vm266, %v337
          %371 = vst.msk [vmem:[%s360 + $0x7a] sm:$0xff] %vm266, %v338
          %372 = vst.msk [vmem:[%s360 + $0x82] sm:$0xff] %vm266, %v339
          %373 = vst.msk [vmem:[%s360 + $0x92] sm:$0xff] %vm266, %v340
          %374 = vst.msk [vmem:[%s360 + $0x9a] sm:$0xff] %vm266, %v341
          %375 = vst.msk [vmem:[%s360 + $0xaa] sm:$0xff] %vm266, %v342
          %376 = vst.msk [vmem:[%s360 + $0xb2] sm:$0xff] %vm266, %v343
          %377 = vst.msk [vmem:[%s360 + $0xc2] sm:$0xff] %vm266, %v344
          %378 = vst.msk [vmem:[%s360 + $0xca] sm:$0xff] %vm266, %v345
          %379 = vst.msk [vmem:[%s360 + $0xda] sm:$0xff] %vm266, %v346
          %380 = vst.msk [vmem:[%s360 + $0xe2] sm:$0xff] %vm266, %v347
          %381 = vst.msk [vmem:[%s360 + $0xf2] sm:$0xff] %vm266, %v348
          %382 = vst.msk [vmem:[%s360 + $0xfa] sm:$0xff] %vm266, %v349
          %383 = vst.msk [vmem:[%s360 + $0x10a] sm:$0xff] %vm266, %v350
          %384 = vst.msk [vmem:[%s360 + $0x112] sm:$0xff] %vm266, %v351
          %385 = vst.msk [vmem:[%s360 + $0x122] sm:$0xff] %vm266, %v352
          %386 = vst.msk [vmem:[%s360 + $0x12a] sm:$0xff] %vm266, %v353
          %387 = vst.msk [vmem:[%s360 + $0x13a] sm:$0xff] %vm266, %v354
          %388 = vst.msk [vmem:[%s360 + $0x142] sm:$0xff] %vm266, %v355
          %389 = vst.msk [vmem:[%s360 + $0x152] sm:$0xff] %vm266, %v356
          %390 = vst.msk [vmem:[%s360 + $0x15a] sm:$0xff] %vm266, %v357
          %391 = vst.msk [vmem:[%s360 + $0x16a] sm:$0xff] %vm266, %v358
          %392 = vst.msk [vmem:[%s360 + $0x172] sm:$0xff] %vm266, %v359
        $region40: #{tpu_custom_call.1} parent=31 // pred_fallthru
          _
        %s393 = smul.u32 %s24, 8
        %s394 = smul.u32 %s393, 24
        %s395 = scalar_lea.vmem [#allocation2], %s394
        %v396 = vld [vmem:[%s395] sm:$0xff]
        %v397 = vld [vmem:[%s395 + $0x8] sm:$0xff]
        %v398 = vld [vmem:[%s395 + $0x18] sm:$0xff]
        %v399 = vld [vmem:[%s395 + $0x20] sm:$0xff]
        %v400 = vld [vmem:[%s395 + $0x30] sm:$0xff]
        %v401 = vld [vmem:[%s395 + $0x38] sm:$0xff]
        %v402 = vld [vmem:[%s395 + $0x48] sm:$0xff]
        %v403 = vld [vmem:[%s395 + $0x50] sm:$0xff]
        %v404 = vld [vmem:[%s395 + $0x60] sm:$0xff]
        %v405 = vld [vmem:[%s395 + $0x68] sm:$0xff]
        %v406 = vld [vmem:[%s395 + $0x78] sm:$0xff]
        %v407 = vld [vmem:[%s395 + $0x80] sm:$0xff]
        %v408 = vld [vmem:[%s395 + $0x90] sm:$0xff]
        %v409 = vld [vmem:[%s395 + $0x98] sm:$0xff]
        %v410 = vld [vmem:[%s395 + $0xa8] sm:$0xff]
        %v411 = vld [vmem:[%s395 + $0xb0] sm:$0xff]
        %v412 = vld [vmem:[%s395 + $0x2] sm:$0xff]
        %v413 = vld [vmem:[%s395 + $0xa] sm:$0xff]
        %v414 = vld [vmem:[%s395 + $0x1a] sm:$0xff]
        %v415 = vld [vmem:[%s395 + $0x22] sm:$0xff]
        %v416 = vld [vmem:[%s395 + $0x32] sm:$0xff]
        %v417 = vld [vmem:[%s395 + $0x3a] sm:$0xff]
        %v418 = vld [vmem:[%s395 + $0x4a] sm:$0xff]
        %v419 = vld [vmem:[%s395 + $0x52] sm:$0xff]
        %v420 = vld [vmem:[%s395 + $0x62] sm:$0xff]
        %v421 = vld [vmem:[%s395 + $0x6a] sm:$0xff]
        %v422 = vld [vmem:[%s395 + $0x7a] sm:$0xff]
        %v423 = vld [vmem:[%s395 + $0x82] sm:$0xff]
        %v424 = vld [vmem:[%s395 + $0x92] sm:$0xff]
        %v425 = vld [vmem:[%s395 + $0x9a] sm:$0xff]
        %v426 = vld [vmem:[%s395 + $0xaa] sm:$0xff]
        %v427 = vld [vmem:[%s395 + $0xb2] sm:$0xff]
        %v428 = vld [vmem:[%s395 + $0x4] sm:$0xff]
        %v429 = vld [vmem:[%s395 + $0xc] sm:$0xff]
        %v430 = vld [vmem:[%s395 + $0x1c] sm:$0xff]
        %v431 = vld [vmem:[%s395 + $0x24] sm:$0xff]
        %v432 = vld [vmem:[%s395 + $0x34] sm:$0xff]
        %v433 = vld [vmem:[%s395 + $0x3c] sm:$0xff]
        %v434 = vld [vmem:[%s395 + $0x4c] sm:$0xff]
        %v435 = vld [vmem:[%s395 + $0x54] sm:$0xff]
        %v436 = vld [vmem:[%s395 + $0x64] sm:$0xff]
        %v437 = vld [vmem:[%s395 + $0x6c] sm:$0xff]
        %v438 = vld [vmem:[%s395 + $0x7c] sm:$0xff]
        %v439 = vld [vmem:[%s395 + $0x84] sm:$0xff]
        %v440 = vld [vmem:[%s395 + $0x94] sm:$0xff]
        %v441 = vld [vmem:[%s395 + $0x9c] sm:$0xff]
        %v442 = vld [vmem:[%s395 + $0xac] sm:$0xff]
        %v443 = vld [vmem:[%s395 + $0xb4] sm:$0xff]
        %s444 = sadd.s32 %s393, 2
        %s445 = smul.u32 %s444, 24
        %s446 = scalar_lea.vmem [#allocation2], %s445
        %v447 = vld [vmem:[%s446] sm:$0xff]
        %v448 = vld [vmem:[%s446 + $0x8] sm:$0xff]
        %v449 = vld [vmem:[%s446 + $0x18] sm:$0xff]
        %v450 = vld [vmem:[%s446 + $0x20] sm:$0xff]
        %v451 = vld [vmem:[%s446 + $0x30] sm:$0xff]
        %v452 = vld [vmem:[%s446 + $0x38] sm:$0xff]
        %v453 = vld [vmem:[%s446 + $0x48] sm:$0xff]
        %v454 = vld [vmem:[%s446 + $0x50] sm:$0xff]
        %v455 = vld [vmem:[%s446 + $0x60] sm:$0xff]
        %v456 = vld [vmem:[%s446 + $0x68] sm:$0xff]
        %v457 = vld [vmem:[%s446 + $0x78] sm:$0xff]
        %v458 = vld [vmem:[%s446 + $0x80] sm:$0xff]
        %v459 = vld [vmem:[%s446 + $0x90] sm:$0xff]
        %v460 = vld [vmem:[%s446 + $0x98] sm:$0xff]
        %v461 = vld [vmem:[%s446 + $0xa8] sm:$0xff]
        %v462 = vld [vmem:[%s446 + $0xb0] sm:$0xff]
        %v463 = vld [vmem:[%s446 + $0x2] sm:$0xff]
        %v464 = vld [vmem:[%s446 + $0xa] sm:$0xff]
        %v465 = vld [vmem:[%s446 + $0x1a] sm:$0xff]
        %v466 = vld [vmem:[%s446 + $0x22] sm:$0xff]
        %v467 = vld [vmem:[%s446 + $0x32] sm:$0xff]
        %v468 = vld [vmem:[%s446 + $0x3a] sm:$0xff]
        %v469 = vld [vmem:[%s446 + $0x4a] sm:$0xff]
        %v470 = vld [vmem:[%s446 + $0x52] sm:$0xff]
        %v471 = vld [vmem:[%s446 + $0x62] sm:$0xff]
        %v472 = vld [vmem:[%s446 + $0x6a] sm:$0xff]
        %v473 = vld [vmem:[%s446 + $0x7a] sm:$0xff]
        %v474 = vld [vmem:[%s446 + $0x82] sm:$0xff]
        %v475 = vld [vmem:[%s446 + $0x92] sm:$0xff]
        %v476 = vld [vmem:[%s446 + $0x9a] sm:$0xff]
        %v477 = vld [vmem:[%s446 + $0xaa] sm:$0xff]
        %v478 = vld [vmem:[%s446 + $0xb2] sm:$0xff]
        %v479 = vld [vmem:[%s446 + $0x4] sm:$0xff]
        %v480 = vld [vmem:[%s446 + $0xc] sm:$0xff]
        %v481 = vld [vmem:[%s446 + $0x1c] sm:$0xff]
        %v482 = vld [vmem:[%s446 + $0x24] sm:$0xff]
        %v483 = vld [vmem:[%s446 + $0x34] sm:$0xff]
        %v484 = vld [vmem:[%s446 + $0x3c] sm:$0xff]
        %v485 = vld [vmem:[%s446 + $0x4c] sm:$0xff]
        %v486 = vld [vmem:[%s446 + $0x54] sm:$0xff]
        %v487 = vld [vmem:[%s446 + $0x64] sm:$0xff]
        %v488 = vld [vmem:[%s446 + $0x6c] sm:$0xff]
        %v489 = vld [vmem:[%s446 + $0x7c] sm:$0xff]
        %v490 = vld [vmem:[%s446 + $0x84] sm:$0xff]
        %v491 = vld [vmem:[%s446 + $0x94] sm:$0xff]
        %v492 = vld [vmem:[%s446 + $0x9c] sm:$0xff]
        %v493 = vld [vmem:[%s446 + $0xac] sm:$0xff]
        %v494 = vld [vmem:[%s446 + $0xb4] sm:$0xff]
        %s495 = sadd.s32 %s393, 4
        %s496 = smul.u32 %s495, 24
        %s497 = scalar_lea.vmem [#allocation2], %s496
        %v498 = vld [vmem:[%s497] sm:$0xff]
        %v499 = vld [vmem:[%s497 + $0x8] sm:$0xff]
        %v500 = vld [vmem:[%s497 + $0x18] sm:$0xff]
        %v501 = vld [vmem:[%s497 + $0x20] sm:$0xff]
        %v502 = vld [vmem:[%s497 + $0x30] sm:$0xff]
        %v503 = vld [vmem:[%s497 + $0x38] sm:$0xff]
        %v504 = vld [vmem:[%s497 + $0x48] sm:$0xff]
        %v505 = vld [vmem:[%s497 + $0x50] sm:$0xff]
        %v506 = vld [vmem:[%s497 + $0x60] sm:$0xff]
        %v507 = vld [vmem:[%s497 + $0x68] sm:$0xff]
        %v508 = vld [vmem:[%s497 + $0x78] sm:$0xff]
        %v509 = vld [vmem:[%s497 + $0x80] sm:$0xff]
        %v510 = vld [vmem:[%s497 + $0x90] sm:$0xff]
        %v511 = vld [vmem:[%s497 + $0x98] sm:$0xff]
        %v512 = vld [vmem:[%s497 + $0xa8] sm:$0xff]
        %v513 = vld [vmem:[%s497 + $0xb0] sm:$0xff]
        %v514 = vld [vmem:[%s497 + $0x2] sm:$0xff]
        %v515 = vld [vmem:[%s497 + $0xa] sm:$0xff]
        %v516 = vld [vmem:[%s497 + $0x1a] sm:$0xff]
        %v517 = vld [vmem:[%s497 + $0x22] sm:$0xff]
        %v518 = vld [vmem:[%s497 + $0x32] sm:$0xff]
        %v519 = vld [vmem:[%s497 + $0x3a] sm:$0xff]
        %v520 = vld [vmem:[%s497 + $0x4a] sm:$0xff]
        %v521 = vld [vmem:[%s497 + $0x52] sm:$0xff]
        %v522 = vld [vmem:[%s497 + $0x62] sm:$0xff]
        %v523 = vld [vmem:[%s497 + $0x6a] sm:$0xff]
        %v524 = vld [vmem:[%s497 + $0x7a] sm:$0xff]
        %v525 = vld [vmem:[%s497 + $0x82] sm:$0xff]
        %v526 = vld [vmem:[%s497 + $0x92] sm:$0xff]
        %v527 = vld [vmem:[%s497 + $0x9a] sm:$0xff]
        %v528 = vld [vmem:[%s497 + $0xaa] sm:$0xff]
        %v529 = vld [vmem:[%s497 + $0xb2] sm:$0xff]
        %v530 = vld [vmem:[%s497 + $0x4] sm:$0xff]
        %v531 = vld [vmem:[%s497 + $0xc] sm:$0xff]
        %v532 = vld [vmem:[%s497 + $0x1c] sm:$0xff]
        %v533 = vld [vmem:[%s497 + $0x24] sm:$0xff]
        %v534 = vld [vmem:[%s497 + $0x34] sm:$0xff]
        %v535 = vld [vmem:[%s497 + $0x3c] sm:$0xff]
        %v536 = vld [vmem:[%s497 + $0x4c] sm:$0xff]
        %v537 = vld [vmem:[%s497 + $0x54] sm:$0xff]
        %v538 = vld [vmem:[%s497 + $0x64] sm:$0xff]
        %v539 = vld [vmem:[%s497 + $0x6c] sm:$0xff]
        %v540 = vld [vmem:[%s497 + $0x7c] sm:$0xff]
        %v541 = vld [vmem:[%s497 + $0x84] sm:$0xff]
        %v542 = vld [vmem:[%s497 + $0x94] sm:$0xff]
        %v543 = vld [vmem:[%s497 + $0x9c] sm:$0xff]
        %v544 = vld [vmem:[%s497 + $0xac] sm:$0xff]
        %v545 = vld [vmem:[%s497 + $0xb4] sm:$0xff]
        %562 = vrot.lane.b32.xlu0 %v412, 16
        %v563 = vpop.permute.xlu0 %562
        %564 = vrot.lane.b32.xlu0 %v413, 16
        %v565 = vpop.permute.xlu0 %564
        %566 = vrot.lane.b32.xlu0 %v414, 16
        %v567 = vpop.permute.xlu0 %566
        %568 = vrot.lane.b32.xlu0 %v415, 16
        %v569 = vpop.permute.xlu0 %568
        %570 = vrot.lane.b32.xlu0 %v416, 16
        %v571 = vpop.permute.xlu0 %570
        %572 = vrot.lane.b32.xlu0 %v417, 16
        %v573 = vpop.permute.xlu0 %572
        %574 = vrot.lane.b32.xlu0 %v418, 16
        %v575 = vpop.permute.xlu0 %574
        %576 = vrot.lane.b32.xlu0 %v419, 16
        %v577 = vpop.permute.xlu0 %576
        %578 = vrot.lane.b32.xlu0 %v420, 16
        %v579 = vpop.permute.xlu0 %578
        %580 = vrot.lane.b32.xlu0 %v421, 16
        %v581 = vpop.permute.xlu0 %580
        %582 = vrot.lane.b32.xlu0 %v422, 16
        %v583 = vpop.permute.xlu0 %582
        %584 = vrot.lane.b32.xlu0 %v423, 16
        %v585 = vpop.permute.xlu0 %584
        %586 = vrot.lane.b32.xlu0 %v424, 16
        %v587 = vpop.permute.xlu0 %586
        %588 = vrot.lane.b32.xlu0 %v425, 16
        %v589 = vpop.permute.xlu0 %588
        %590 = vrot.lane.b32.xlu0 %v426, 16
        %v591 = vpop.permute.xlu0 %590
        %592 = vrot.lane.b32.xlu0 %v427, 16
        %v593 = vpop.permute.xlu0 %592
        %626 = vrot.lane.b32.xlu0 %v428, 32
        %v627 = vpop.permute.xlu0 %626
        %628 = vrot.lane.b32.xlu0 %v429, 32
        %v629 = vpop.permute.xlu0 %628
        %630 = vrot.lane.b32.xlu0 %v430, 32
        %v631 = vpop.permute.xlu0 %630
        %632 = vrot.lane.b32.xlu0 %v431, 32
        %v633 = vpop.permute.xlu0 %632
        %634 = vrot.lane.b32.xlu0 %v432, 32
        %v635 = vpop.permute.xlu0 %634
        %636 = vrot.lane.b32.xlu0 %v433, 32
        %v637 = vpop.permute.xlu0 %636
        %638 = vrot.lane.b32.xlu0 %v434, 32
        %v639 = vpop.permute.xlu0 %638
        %640 = vrot.lane.b32.xlu0 %v435, 32
        %v641 = vpop.permute.xlu0 %640
        %642 = vrot.lane.b32.xlu0 %v436, 32
        %v643 = vpop.permute.xlu0 %642
        %644 = vrot.lane.b32.xlu0 %v437, 32
        %v645 = vpop.permute.xlu0 %644
        %646 = vrot.lane.b32.xlu0 %v438, 32
        %v647 = vpop.permute.xlu0 %646
        %648 = vrot.lane.b32.xlu0 %v439, 32
        %v649 = vpop.permute.xlu0 %648
        %650 = vrot.lane.b32.xlu0 %v440, 32
        %v651 = vpop.permute.xlu0 %650
        %652 = vrot.lane.b32.xlu0 %v441, 32
        %v653 = vpop.permute.xlu0 %652
        %654 = vrot.lane.b32.xlu0 %v442, 32
        %v655 = vpop.permute.xlu0 %654
        %656 = vrot.lane.b32.xlu0 %v443, 32
        %v657 = vpop.permute.xlu0 %656
        %690 = vrot.lane.b32.xlu0 %v447, 48
        %v691 = vpop.permute.xlu0 %690
        %692 = vrot.lane.b32.xlu0 %v448, 48
        %v693 = vpop.permute.xlu0 %692
        %694 = vrot.lane.b32.xlu0 %v449, 48
        %v695 = vpop.permute.xlu0 %694
        %696 = vrot.lane.b32.xlu0 %v450, 48
        %v697 = vpop.permute.xlu0 %696
        %698 = vrot.lane.b32.xlu0 %v451, 48
        %v699 = vpop.permute.xlu0 %698
        %700 = vrot.lane.b32.xlu0 %v452, 48
        %v701 = vpop.permute.xlu0 %700
        %702 = vrot.lane.b32.xlu0 %v453, 48
        %v703 = vpop.permute.xlu0 %702
        %704 = vrot.lane.b32.xlu0 %v454, 48
        %v705 = vpop.permute.xlu0 %704
        %706 = vrot.lane.b32.xlu0 %v455, 48
        %v707 = vpop.permute.xlu0 %706
        %708 = vrot.lane.b32.xlu0 %v456, 48
        %v709 = vpop.permute.xlu0 %708
        %710 = vrot.lane.b32.xlu0 %v457, 48
        %v711 = vpop.permute.xlu0 %710
        %712 = vrot.lane.b32.xlu0 %v458, 48
        %v713 = vpop.permute.xlu0 %712
        %714 = vrot.lane.b32.xlu0 %v459, 48
        %v715 = vpop.permute.xlu0 %714
        %716 = vrot.lane.b32.xlu0 %v460, 48
        %v717 = vpop.permute.xlu0 %716
        %718 = vrot.lane.b32.xlu0 %v461, 48
        %v719 = vpop.permute.xlu0 %718
        %720 = vrot.lane.b32.xlu0 %v462, 48
        %v721 = vpop.permute.xlu0 %720
        %754 = vrot.lane.b32.xlu0 %v463, 64
        %v755 = vpop.permute.xlu0 %754
        %756 = vrot.lane.b32.xlu0 %v464, 64
        %v757 = vpop.permute.xlu0 %756
        %758 = vrot.lane.b32.xlu0 %v465, 64
        %v759 = vpop.permute.xlu0 %758
        %760 = vrot.lane.b32.xlu0 %v466, 64
        %v761 = vpop.permute.xlu0 %760
        %762 = vrot.lane.b32.xlu0 %v467, 64
        %v763 = vpop.permute.xlu0 %762
        %764 = vrot.lane.b32.xlu0 %v468, 64
        %v765 = vpop.permute.xlu0 %764
        %766 = vrot.lane.b32.xlu0 %v469, 64
        %v767 = vpop.permute.xlu0 %766
        %768 = vrot.lane.b32.xlu0 %v470, 64
        %v769 = vpop.permute.xlu0 %768
        %770 = vrot.lane.b32.xlu0 %v471, 64
        %v771 = vpop.permute.xlu0 %770
        %772 = vrot.lane.b32.xlu0 %v472, 64
        %v773 = vpop.permute.xlu0 %772
        %774 = vrot.lane.b32.xlu0 %v473, 64
        %v775 = vpop.permute.xlu0 %774
        %776 = vrot.lane.b32.xlu0 %v474, 64
        %v777 = vpop.permute.xlu0 %776
        %778 = vrot.lane.b32.xlu0 %v475, 64
        %v779 = vpop.permute.xlu0 %778
        %780 = vrot.lane.b32.xlu0 %v476, 64
        %v781 = vpop.permute.xlu0 %780
        %782 = vrot.lane.b32.xlu0 %v477, 64
        %v783 = vpop.permute.xlu0 %782
        %784 = vrot.lane.b32.xlu0 %v478, 64
        %v785 = vpop.permute.xlu0 %784
        %818 = vrot.lane.b32.xlu0 %v479, 80
        %v819 = vpop.permute.xlu0 %818
        %820 = vrot.lane.b32.xlu0 %v480, 80
        %v821 = vpop.permute.xlu0 %820
        %822 = vrot.lane.b32.xlu0 %v481, 80
        %v823 = vpop.permute.xlu0 %822
        %824 = vrot.lane.b32.xlu0 %v482, 80
        %v825 = vpop.permute.xlu0 %824
        %826 = vrot.lane.b32.xlu0 %v483, 80
        %v827 = vpop.permute.xlu0 %826
        %828 = vrot.lane.b32.xlu0 %v484, 80
        %v829 = vpop.permute.xlu0 %828
        %830 = vrot.lane.b32.xlu0 %v485, 80
        %v831 = vpop.permute.xlu0 %830
        %832 = vrot.lane.b32.xlu0 %v486, 80
        %v833 = vpop.permute.xlu0 %832
        %834 = vrot.lane.b32.xlu0 %v487, 80
        %v835 = vpop.permute.xlu0 %834
        %836 = vrot.lane.b32.xlu0 %v488, 80
        %v837 = vpop.permute.xlu0 %836
        %838 = vrot.lane.b32.xlu0 %v489, 80
        %v839 = vpop.permute.xlu0 %838
        %840 = vrot.lane.b32.xlu0 %v490, 80
        %v841 = vpop.permute.xlu0 %840
        %842 = vrot.lane.b32.xlu0 %v491, 80
        %v843 = vpop.permute.xlu0 %842
        %844 = vrot.lane.b32.xlu0 %v492, 80
        %v845 = vpop.permute.xlu0 %844
        %846 = vrot.lane.b32.xlu0 %v493, 80
        %v847 = vpop.permute.xlu0 %846
        %848 = vrot.lane.b32.xlu0 %v494, 80
        %v849 = vpop.permute.xlu0 %848
        %882 = vrot.lane.b32.xlu0 %v498, 96
        %v883 = vpop.permute.xlu0 %882
        %884 = vrot.lane.b32.xlu0 %v499, 96
        %v885 = vpop.permute.xlu0 %884
        %886 = vrot.lane.b32.xlu0 %v500, 96
        %v887 = vpop.permute.xlu0 %886
        %888 = vrot.lane.b32.xlu0 %v501, 96
        %v889 = vpop.permute.xlu0 %888
        %890 = vrot.lane.b32.xlu0 %v502, 96
        %v891 = vpop.permute.xlu0 %890
        %892 = vrot.lane.b32.xlu0 %v503, 96
        %v893 = vpop.permute.xlu0 %892
        %894 = vrot.lane.b32.xlu0 %v504, 96
        %v895 = vpop.permute.xlu0 %894
        %896 = vrot.lane.b32.xlu0 %v505, 96
        %v897 = vpop.permute.xlu0 %896
        %898 = vrot.lane.b32.xlu0 %v506, 96
        %v899 = vpop.permute.xlu0 %898
        %900 = vrot.lane.b32.xlu0 %v507, 96
        %v901 = vpop.permute.xlu0 %900
        %902 = vrot.lane.b32.xlu0 %v508, 96
        %v903 = vpop.permute.xlu0 %902
        %904 = vrot.lane.b32.xlu0 %v509, 96
        %v905 = vpop.permute.xlu0 %904
        %906 = vrot.lane.b32.xlu0 %v510, 96
        %v907 = vpop.permute.xlu0 %906
        %908 = vrot.lane.b32.xlu0 %v511, 96
        %v909 = vpop.permute.xlu0 %908
        %910 = vrot.lane.b32.xlu0 %v512, 96
        %v911 = vpop.permute.xlu0 %910
        %912 = vrot.lane.b32.xlu0 %v513, 96
        %v913 = vpop.permute.xlu0 %912
        %946 = vrot.lane.b32.xlu0 %v514, 112
        %v947 = vpop.permute.xlu0 %946
        %948 = vrot.lane.b32.xlu0 %v515, 112
        %v949 = vpop.permute.xlu0 %948
        %950 = vrot.lane.b32.xlu0 %v516, 112
        %v951 = vpop.permute.xlu0 %950
        %952 = vrot.lane.b32.xlu0 %v517, 112
        %v953 = vpop.permute.xlu0 %952
        %954 = vrot.lane.b32.xlu0 %v518, 112
        %v955 = vpop.permute.xlu0 %954
        %956 = vrot.lane.b32.xlu0 %v519, 112
        %v957 = vpop.permute.xlu0 %956
        %958 = vrot.lane.b32.xlu0 %v520, 112
        %v959 = vpop.permute.xlu0 %958
        %960 = vrot.lane.b32.xlu0 %v521, 112
        %v961 = vpop.permute.xlu0 %960
        %962 = vrot.lane.b32.xlu0 %v522, 112
        %v963 = vpop.permute.xlu0 %962
        %964 = vrot.lane.b32.xlu0 %v523, 112
        %v965 = vpop.permute.xlu0 %964
        %966 = vrot.lane.b32.xlu0 %v524, 112
        %v967 = vpop.permute.xlu0 %966
        %968 = vrot.lane.b32.xlu0 %v525, 112
        %v969 = vpop.permute.xlu0 %968
        %970 = vrot.lane.b32.xlu0 %v526, 112
        %v971 = vpop.permute.xlu0 %970
        %972 = vrot.lane.b32.xlu0 %v527, 112
        %v973 = vpop.permute.xlu0 %972
        %974 = vrot.lane.b32.xlu0 %v528, 112
        %v975 = vpop.permute.xlu0 %974
        %976 = vrot.lane.b32.xlu0 %v529, 112
        %v977 = vpop.permute.xlu0 %976
        %vm994 = vcmask 130048
        %v995 = vsel %vm994, %v396, %v563
        %v996 = vsel %vm994, %v397, %v565
        %v997 = vsel %vm994, %v398, %v567
        %v998 = vsel %vm994, %v399, %v569
        %v999 = vsel %vm994, %v400, %v571
        %v1000 = vsel %vm994, %v401, %v573
        %v1001 = vsel %vm994, %v402, %v575
        %v1002 = vsel %vm994, %v403, %v577
        %v1003 = vsel %vm994, %v404, %v579
        %v1004 = vsel %vm994, %v405, %v581
        %v1005 = vsel %vm994, %v406, %v583
        %v1006 = vsel %vm994, %v407, %v585
        %v1007 = vsel %vm994, %v408, %v587
        %v1008 = vsel %vm994, %v409, %v589
        %v1009 = vsel %vm994, %v410, %v591
        %v1010 = vsel %vm994, %v411, %v593
        %vm1011 = vcmask 261120
        %v1012 = vsel %vm1011, %v995, %v627
        %v1013 = vsel %vm1011, %v996, %v629
        %v1014 = vsel %vm1011, %v997, %v631
        %v1015 = vsel %vm1011, %v998, %v633
        %v1016 = vsel %vm1011, %v999, %v635
        %v1017 = vsel %vm1011, %v1000, %v637
        %v1018 = vsel %vm1011, %v1001, %v639
        %v1019 = vsel %vm1011, %v1002, %v641
        %v1020 = vsel %vm1011, %v1003, %v643
        %v1021 = vsel %vm1011, %v1004, %v645
        %v1022 = vsel %vm1011, %v1005, %v647
        %v1023 = vsel %vm1011, %v1006, %v649
        %v1024 = vsel %vm1011, %v1007, %v651
        %v1025 = vsel %vm1011, %v1008, %v653
        %v1026 = vsel %vm1011, %v1009, %v655
        %v1027 = vsel %vm1011, %v1010, %v657
        %vm1028 = vcmask 392192
        %v1029 = vsel %vm1028, %v1012, %v691
        %v1030 = vsel %vm1028, %v1013, %v693
        %v1031 = vsel %vm1028, %v1014, %v695
        %v1032 = vsel %vm1028, %v1015, %v697
        %v1033 = vsel %vm1028, %v1016, %v699
        %v1034 = vsel %vm1028, %v1017, %v701
        %v1035 = vsel %vm1028, %v1018, %v703
        %v1036 = vsel %vm1028, %v1019, %v705
        %v1037 = vsel %vm1028, %v1020, %v707
        %v1038 = vsel %vm1028, %v1021, %v709
        %v1039 = vsel %vm1028, %v1022, %v711
        %v1040 = vsel %vm1028, %v1023, %v713
        %v1041 = vsel %vm1028, %v1024, %v715
        %v1042 = vsel %vm1028, %v1025, %v717
        %v1043 = vsel %vm1028, %v1026, %v719
        %v1044 = vsel %vm1028, %v1027, %v721
        %vm1045 = vcmask 523264
        %v1046 = vsel %vm1045, %v1029, %v755
        %v1047 = vsel %vm1045, %v1030, %v757
        %v1048 = vsel %vm1045, %v1031, %v759
        %v1049 = vsel %vm1045, %v1032, %v761
        %v1050 = vsel %vm1045, %v1033, %v763
        %v1051 = vsel %vm1045, %v1034, %v765
        %v1052 = vsel %vm1045, %v1035, %v767
        %v1053 = vsel %vm1045, %v1036, %v769
        %v1054 = vsel %vm1045, %v1037, %v771
        %v1055 = vsel %vm1045, %v1038, %v773
        %v1056 = vsel %vm1045, %v1039, %v775
        %v1057 = vsel %vm1045, %v1040, %v777
        %v1058 = vsel %vm1045, %v1041, %v779
        %v1059 = vsel %vm1045, %v1042, %v781
        %v1060 = vsel %vm1045, %v1043, %v783
        %v1061 = vsel %vm1045, %v1044, %v785
        %vm1062 = vcmask 654336
        %v1063 = vsel %vm1062, %v1046, %v819
        %v1064 = vsel %vm1062, %v1047, %v821
        %v1065 = vsel %vm1062, %v1048, %v823
        %v1066 = vsel %vm1062, %v1049, %v825
        %v1067 = vsel %vm1062, %v1050, %v827
        %v1068 = vsel %vm1062, %v1051, %v829
        %v1069 = vsel %vm1062, %v1052, %v831
        %v1070 = vsel %vm1062, %v1053, %v833
        %v1071 = vsel %vm1062, %v1054, %v835
        %v1072 = vsel %vm1062, %v1055, %v837
        %v1073 = vsel %vm1062, %v1056, %v839
        %v1074 = vsel %vm1062, %v1057, %v841
        %v1075 = vsel %vm1062, %v1058, %v843
        %v1076 = vsel %vm1062, %v1059, %v845
        %v1077 = vsel %vm1062, %v1060, %v847
        %v1078 = vsel %vm1062, %v1061, %v849
        %vm1079 = vcmask 785408
        %v1080 = vsel %vm1079, %v1063, %v883
        %v1081 = vsel %vm1079, %v1064, %v885
        %v1082 = vsel %vm1079, %v1065, %v887
        %v1083 = vsel %vm1079, %v1066, %v889
        %v1084 = vsel %vm1079, %v1067, %v891
        %v1085 = vsel %vm1079, %v1068, %v893
        %v1086 = vsel %vm1079, %v1069, %v895
        %v1087 = vsel %vm1079, %v1070, %v897
        %v1088 = vsel %vm1079, %v1071, %v899
        %v1089 = vsel %vm1079, %v1072, %v901
        %v1090 = vsel %vm1079, %v1073, %v903
        %v1091 = vsel %vm1079, %v1074, %v905
        %v1092 = vsel %vm1079, %v1075, %v907
        %v1093 = vsel %vm1079, %v1076, %v909
        %v1094 = vsel %vm1079, %v1077, %v911
        %v1095 = vsel %vm1079, %v1078, %v913
        %vm1096 = vcmask 916480
        %v1097 = vsel %vm1096, %v1080, %v947
        %v1098 = vsel %vm1096, %v1081, %v949
        %v1099 = vsel %vm1096, %v1082, %v951
        %v1100 = vsel %vm1096, %v1083, %v953
        %v1101 = vsel %vm1096, %v1084, %v955
        %v1102 = vsel %vm1096, %v1085, %v957
        %v1103 = vsel %vm1096, %v1086, %v959
        %v1104 = vsel %vm1096, %v1087, %v961
        %v1105 = vsel %vm1096, %v1088, %v963
        %v1106 = vsel %vm1096, %v1089, %v965
        %v1107 = vsel %vm1096, %v1090, %v967
        %v1108 = vsel %vm1096, %v1091, %v969
        %v1109 = vsel %vm1096, %v1092, %v971
        %v1110 = vsel %vm1096, %v1093, %v973
        %v1111 = vsel %vm1096, %v1094, %v975
        %v1112 = vsel %vm1096, %v1095, %v977
        %v1113 = vld [vmem:[%s245] sm:$0xff]
        %v1114 = vld [vmem:[%s245 + $0x8] sm:$0xff]
        %v1115 = vld [vmem:[%s245 + $0x10] sm:$0xff]
        %v1116 = vld [vmem:[%s245 + $0x18] sm:$0xff]
        %v1117 = vld [vmem:[%s245 + $0x20] sm:$0xff]
        %v1118 = vld [vmem:[%s245 + $0x28] sm:$0xff]
        %v1119 = vld [vmem:[%s245 + $0x30] sm:$0xff]
        %v1120 = vld [vmem:[%s245 + $0x38] sm:$0xff]
        %v1121 = vld [vmem:[%s245 + $0x40] sm:$0xff]
        %v1122 = vld [vmem:[%s245 + $0x48] sm:$0xff]
        %v1123 = vld [vmem:[%s245 + $0x50] sm:$0xff]
        %v1124 = vld [vmem:[%s245 + $0x58] sm:$0xff]
        %v1125 = vld [vmem:[%s245 + $0x60] sm:$0xff]
        %v1126 = vld [vmem:[%s245 + $0x68] sm:$0xff]
        %v1127 = vld [vmem:[%s245 + $0x70] sm:$0xff]
        %v1128 = vld [vmem:[%s245 + $0x78] sm:$0xff]
        %v1129 = vld [vmem:[%s245 + $0x80] sm:$0xff]
        %v1130 = vld [vmem:[%s245 + $0x88] sm:$0xff]
        %v1131 = vld [vmem:[%s248] sm:$0x1]
        %v1133 = vperm.slane %v1131, 0
        %v1136 = vsel %vm994, %v530, 0
        %v1139 = vsel %vm994, %v531, 0
        %v1142 = vsel %vm994, %v532, 0
        %v1145 = vsel %vm994, %v533, 0
        %v1148 = vsel %vm994, %v534, 0
        %v1151 = vsel %vm994, %v535, 0
        %v1154 = vsel %vm994, %v536, 0
        %v1157 = vsel %vm994, %v537, 0
        %v1160 = vsel %vm994, %v538, 0
        %v1163 = vsel %vm994, %v539, 0
        %v1166 = vsel %vm994, %v540, 0
        %v1169 = vsel %vm994, %v541, 0
        %v1172 = vsel %vm994, %v542, 0
        %v1175 = vsel %vm994, %v543, 0
        %v1178 = vsel %vm994, %v544, 0
        %v1181 = vsel %vm994, %v545, 0
        %1183 = vmatpush.msra.mxu0 %v1128
        %1184 = vmatpush.msra.mxu0 %v1127
        %1185 = vmatpush.msra.mxu0 %v1126
        %1186 = vmatpush.msra.mxu0 %v1125
        %1187 = vmatpush.msra.mxu0 %v1124
        %1188 = vmatpush.msra.mxu0 %v1123
        %1189 = vmatpush.msra.mxu0 %v1122
        %1190 = vmatpush.msra.mxu0 %v1121
        %1191 = vmatpush.msra.mxu0 %v1120
        %1192 = vmatpush.msra.mxu0 %v1119
        %1193 = vmatpush.msra.mxu0 %v1118
        %1194 = vmatpush.msra.mxu0 %v1117
        %1195 = vmatpush.msra.mxu0 %v1116
        %1196 = vmatpush.msra.mxu0 %v1115
        %1197 = vmatpush.msra.mxu0 %v1114
        %1198 = vmatpush.msra.mxu0 %v1113
        %1199 = vmatmul.f32.gmra.mxu0 %v1097
        %v1200 = vpop.f32.mrf.mxu0
        %v1201 = vadd.f32 %v1133, %v1200
        %1202 = vmatmul.f32.gmra.mxu0 %v1098
        %v1203 = vpop.f32.mrf.mxu0
        %v1204 = vadd.f32 %v1133, %v1203
        %1205 = vmatmul.f32.gmra.mxu0 %v1099
        %v1206 = vpop.f32.mrf.mxu0
        %v1207 = vadd.f32 %v1133, %v1206
        %1208 = vmatmul.f32.gmra.mxu0 %v1100
        %v1209 = vpop.f32.mrf.mxu0
        %v1210 = vadd.f32 %v1133, %v1209
        %1211 = vmatmul.f32.gmra.mxu0 %v1101
        %v1212 = vpop.f32.mrf.mxu0
        %v1213 = vadd.f32 %v1133, %v1212
        %1214 = vmatmul.f32.gmra.mxu0 %v1102
        %v1215 = vpop.f32.mrf.mxu0
        %v1216 = vadd.f32 %v1133, %v1215
        %1217 = vmatmul.f32.gmra.mxu0 %v1103
        %v1218 = vpop.f32.mrf.mxu0
        %v1219 = vadd.f32 %v1133, %v1218
        %1220 = vmatmul.f32.gmra.mxu0 %v1104
        %v1221 = vpop.f32.mrf.mxu0
        %v1222 = vadd.f32 %v1133, %v1221
        %1223 = vmatmul.f32.gmra.mxu0 %v1105
        %v1224 = vpop.f32.mrf.mxu0
        %v1225 = vadd.f32 %v1133, %v1224
        %1226 = vmatmul.f32.gmra.mxu0 %v1106
        %v1227 = vpop.f32.mrf.mxu0
        %v1228 = vadd.f32 %v1133, %v1227
        %1229 = vmatmul.f32.gmra.mxu0 %v1107
        %v1230 = vpop.f32.mrf.mxu0
        %v1231 = vadd.f32 %v1133, %v1230
        %1232 = vmatmul.f32.gmra.mxu0 %v1108
        %v1233 = vpop.f32.mrf.mxu0
        %v1234 = vadd.f32 %v1133, %v1233
        %1235 = vmatmul.f32.gmra.mxu0 %v1109
        %v1236 = vpop.f32.mrf.mxu0
        %v1237 = vadd.f32 %v1133, %v1236
        %1238 = vmatmul.f32.gmra.mxu0 %v1110
        %v1239 = vpop.f32.mrf.mxu0
        %v1240 = vadd.f32 %v1133, %v1239
        %1241 = vmatmul.f32.gmra.mxu0 %v1111
        %v1242 = vpop.f32.mrf.mxu0
        %v1243 = vadd.f32 %v1133, %v1242
        %1244 = vmatmul.f32.gmra.mxu0 %v1112
        %v1245 = vpop.f32.mrf.mxu0
        %v1246 = vadd.f32 %v1133, %v1245
        %1247 = vdwg.mxu0
        %1248 = vmatpush.msra.mxu0 0.0
        %1249 = vmatpush.msra.mxu0 0.0
        %1250 = vmatpush.msra.mxu0 0.0
        %1251 = vmatpush.msra.mxu0 0.0
        %1252 = vmatpush.msra.mxu0 0.0
        %1253 = vmatpush.msra.mxu0 0.0
        %1254 = vmatpush.msra.mxu0 0.0
        %1255 = vmatpush.msra.mxu0 0.0
        %1256 = vmatpush.msra.mxu0 0.0
        %1257 = vmatpush.msra.mxu0 0.0
        %1258 = vmatpush.msra.mxu0 0.0
        %1259 = vmatpush.msra.mxu0 0.0
        %1260 = vmatpush.msra.mxu0 0.0
        %1261 = vmatpush.msra.mxu0 0.0
        %1262 = vmatpush.msra.mxu0 %v1130
        %1263 = vmatpush.msra.mxu0 %v1129
        %1264 = vmatmul.f32.gmra.mxu0 %v1136
        %v1265 = vpop.f32.mrf.mxu0
        %v1266 = vadd.f32 %v1201, %v1265
        %1267 = vmatmul.f32.gmra.mxu0 %v1139
        %v1268 = vpop.f32.mrf.mxu0
        %v1269 = vadd.f32 %v1204, %v1268
        %1270 = vmatmul.f32.gmra.mxu0 %v1142
        %v1271 = vpop.f32.mrf.mxu0
        %v1272 = vadd.f32 %v1207, %v1271
        %1273 = vmatmul.f32.gmra.mxu0 %v1145
        %v1274 = vpop.f32.mrf.mxu0
        %v1275 = vadd.f32 %v1210, %v1274
        %1276 = vmatmul.f32.gmra.mxu0 %v1148
        %v1277 = vpop.f32.mrf.mxu0
        %v1278 = vadd.f32 %v1213, %v1277
        %1279 = vmatmul.f32.gmra.mxu0 %v1151
        %v1280 = vpop.f32.mrf.mxu0
        %v1281 = vadd.f32 %v1216, %v1280
        %1282 = vmatmul.f32.gmra.mxu0 %v1154
        %v1283 = vpop.f32.mrf.mxu0
        %v1284 = vadd.f32 %v1219, %v1283
        %1285 = vmatmul.f32.gmra.mxu0 %v1157
        %v1286 = vpop.f32.mrf.mxu0
        %v1287 = vadd.f32 %v1222, %v1286
        %1288 = vmatmul.f32.gmra.mxu0 %v1160
        %v1289 = vpop.f32.mrf.mxu0
        %v1290 = vadd.f32 %v1225, %v1289
        %1291 = vmatmul.f32.gmra.mxu0 %v1163
        %v1292 = vpop.f32.mrf.mxu0
        %v1293 = vadd.f32 %v1228, %v1292
        %1294 = vmatmul.f32.gmra.mxu0 %v1166
        %v1295 = vpop.f32.mrf.mxu0
        %v1296 = vadd.f32 %v1231, %v1295
        %1297 = vmatmul.f32.gmra.mxu0 %v1169
        %v1298 = vpop.f32.mrf.mxu0
        %v1299 = vadd.f32 %v1234, %v1298
        %1300 = vmatmul.f32.gmra.mxu0 %v1172
        %v1301 = vpop.f32.mrf.mxu0
        %v1302 = vadd.f32 %v1237, %v1301
        %1303 = vmatmul.f32.gmra.mxu0 %v1175
        %v1304 = vpop.f32.mrf.mxu0
        %v1305 = vadd.f32 %v1240, %v1304
        %1306 = vmatmul.f32.gmra.mxu0 %v1178
        %v1307 = vpop.f32.mrf.mxu0
        %v1308 = vadd.f32 %v1243, %v1307
        %1309 = vmatmul.f32.gmra.mxu0 %v1181
        %v1310 = vpop.f32.mrf.mxu0
        %v1311 = vadd.f32 %v1246, %v1310
        %1312 = vdwg.mxu0
        %v1313 = vmax.f32 %v1266, 0.0
        %v1314 = vmax.f32 %v1269, 0.0
        %v1315 = vmax.f32 %v1272, 0.0
        %v1316 = vmax.f32 %v1275, 0.0
        %v1317 = vmax.f32 %v1278, 0.0
        %v1318 = vmax.f32 %v1281, 0.0
        %v1319 = vmax.f32 %v1284, 0.0
        %v1320 = vmax.f32 %v1287, 0.0
        %v1321 = vmax.f32 %v1290, 0.0
        %v1322 = vmax.f32 %v1293, 0.0
        %v1323 = vmax.f32 %v1296, 0.0
        %v1324 = vmax.f32 %v1299, 0.0
        %v1325 = vmax.f32 %v1302, 0.0
        %v1326 = vmax.f32 %v1305, 0.0
        %v1327 = vmax.f32 %v1308, 0.0
        %v1328 = vmax.f32 %v1311, 0.0
        %1329 = vst.msk [vmem:[%s260] sm:$0xff] %vm1011, %v1313
        %1330 = vst.msk [vmem:[%s260 + $0x8] sm:$0xff] %vm1011, %v1314
        %1331 = vst.msk [vmem:[%s260 + $0x10] sm:$0xff] %vm1011, %v1315
        %1332 = vst.msk [vmem:[%s260 + $0x18] sm:$0xff] %vm1011, %v1316
        %1333 = vst.msk [vmem:[%s260 + $0x20] sm:$0xff] %vm1011, %v1317
        %1334 = vst.msk [vmem:[%s260 + $0x28] sm:$0xff] %vm1011, %v1318
        %1335 = vst.msk [vmem:[%s260 + $0x30] sm:$0xff] %vm1011, %v1319
        %1336 = vst.msk [vmem:[%s260 + $0x38] sm:$0xff] %vm1011, %v1320
        %1337 = vst.msk [vmem:[%s260 + $0x40] sm:$0xff] %vm1011, %v1321
        %1338 = vst.msk [vmem:[%s260 + $0x48] sm:$0xff] %vm1011, %v1322
        %1339 = vst.msk [vmem:[%s260 + $0x50] sm:$0xff] %vm1011, %v1323
        %1340 = vst.msk [vmem:[%s260 + $0x58] sm:$0xff] %vm1011, %v1324
        %1341 = vst.msk [vmem:[%s260 + $0x60] sm:$0xff] %vm1011, %v1325
        %1342 = vst.msk [vmem:[%s260 + $0x68] sm:$0xff] %vm1011, %v1326
        %1343 = vst.msk [vmem:[%s260 + $0x70] sm:$0xff] %vm1011, %v1327
        %1344 = vst.msk [vmem:[%s260 + $0x78] sm:$0xff] %vm1011, %v1328
        %s1345 = smul.u32 16, %s24
        %p1346 = scmp.lt.s32.totalorder %s22, 1
        %s1347 = scalar_select %p1346, %s22, 1
        %p1348 = scmp.lt.s32.totalorder %s1345, 31
        %s1349 = scalar_select %p1348, %s1345, 31
        %p1350 = scmp.lt.s32.totalorder %s23, 0
        %s1351 = scalar_select %p1350, %s23, 0
        %s1352 = sadd.s32 %s1351, %s1349
        %s1353 = smul.addr %s1347, 32
        %s1354 = sadd.s32 %s1352, %s1353
        %s1355 = smul.addr %s1354, 8
        %s1356 = scalar_lea.vmem %s3, %s1355
        // Predicated region
        $region41: #{tpu_custom_call.1} parent=31 // pred_check
          %p1357 = pneg %p136
        $region42: #{tpu_custom_call.1} parent=31 // pred_check_branch
          %1359 = sbr.rel (%p1357) target = $region44
        $region43: #{tpu_custom_call.1} parent=31 // pred_region
          %s1360 = smul.u32 16, %s24
        $region44: #{tpu_custom_call.1} parent=31 // pred_fallthru
          _
      $region32: #{tpu_custom_call.1} parent=5 // pred_fallthru
        _
      %p1361 = scmp.le.s32.totalorder 2, %s12
      // Predicated region
      $region45: #{tpu_custom_call.1} parent=5 // pred_check
        %p1362 = pneg %p1361
      $region46: #{tpu_custom_call.1} parent=5 // pred_check_branch
        %1364 = sbr.rel (%p1362) target = $region48
      $region47: #{tpu_custom_call.1} parent=5 // pred_region
        %s1365 = ssub.s32 %s12, 2
        // Predicated region
        $region49: #{tpu_custom_call.1} parent=47 // pred_check
          %p1366 = pneg %p142
        $region50: #{tpu_custom_call.1} parent=47 // pred_check_branch
          %1368 = sbr.rel (%p1366) target = $region52
        $region51: #{tpu_custom_call.1} parent=47 // pred_region
          %s1369 = smul.u32 16, %s27
          %p1370 = scmp.lt.s32.totalorder %s25, 1
          %s1371 = scalar_select %p1370, %s25, 1
          %p1372 = scmp.lt.s32.totalorder %s1369, 31
          %s1373 = scalar_select %p1372, %s1369, 31
          %p1374 = scmp.lt.s32.totalorder %s26, 0
          %s1375 = scalar_select %p1374, %s26, 0
          %s1376 = sadd.s32 %s1375, %s1373
          %s1377 = smul.addr %s1371, 32
          %s1378 = sadd.s32 %s1376, %s1377
          %s1379 = smul.addr %s1378, 8
          %s1380 = scalar_lea.vmem %s3, %s1379
        $region52: #{tpu_custom_call.1} parent=47 // pred_fallthru
          _
      $region48: #{tpu_custom_call.1} parent=5 // pred_fallthru
        _
    $region6: #{tpu_custom_call.1} parent=1 // loop_footer
      %s16 = sadd.s32 1, %s12
    $region7: #{tpu_custom_call.1} parent=1 // loop_footer_branch
      %11 = sbr.rel target = $region3
    $region8: #{tpu_custom_call.1} parent=1 // loop_exit
      _
    %1381 = vsyncpa [#allocation4], 1
    %s1382 = scalar_lea.sflag [#allocation4], 1
    %1383 = vsyncpa %s1382, 1

</llo_original>
